<compile_context>
chip_gen: v7x
topology: tpu7x:2x2x1
jax: 0.10.0
libtpu: 0.0.40
codegen_flags: <defaults>
</compile_context>

<pallas_src>
import numpy as np
import jax
import jax.numpy as jnp
from jax import lax
from jax.experimental import pallas as pl
from jax.experimental.pallas import tpu as pltpu


_UNROLL_MAX = 32  # max statically-unrolled 128-lane chunks before switching to fori_loop


def _pad_to(x, m):
    return ((x + m - 1) // m) * m


def _rowsum_kernel(loss_ref, out_ref):
    # loss_ref: (TN, TT) tile of the stacked constraint-loss matrix (native dtype),
    #           TT % 128 == 0.
    # out_ref:  (TN, 128) f32 lane-dense partial sums.  Same output block index for
    #           every k -> resident accumulator along the (last, "arbitrary") k axis;
    #           written back to HBM only when the (p, i) block changes.
    k = pl.program_id(2)

    @pl.when(k == 0)
    def _init():
        out_ref[...] = jnp.zeros_like(out_ref)

    zero = jnp.zeros((), dtype=loss_ref.dtype)
    nchunks = loss_ref.shape[-1] // 128

    def masked_f32(xc):
        # Fused clamp(min=0) + NaN mask in the NATIVE dtype: (NaN > 0) is False, so
        # NaNs become 0 in the same select (matches torch clamp(min=0) + nansum).
        # Widen to f32 only for the accumulate.
        return jnp.where(xc > zero, xc, zero).astype(jnp.float32)

    acc = out_ref[...]
    if nchunks <= _UNROLL_MAX:
        # static slices, fully unrolled
        for c in range(nchunks):
            acc = acc + masked_f32(loss_ref[:, c * 128:(c + 1) * 128])
    else:
        def body(c, a):
            start = pl.multiple_of(c * 128, 128)
            return a + masked_f32(loss_ref[:, pl.ds(start, 128)])
        acc = lax.fori_loop(0, nchunks, body, acc, unroll=8)
    out_ref[...] = acc


def lossmodel_forward(loss_tensors, lmbd, lmbd_p, *, tn=128, tt=None):
    """Returns (total lmbd_loss scalar, per-constraint losses (nconstr,)).

    loss_tensors: [nconstr, T] stacked constraint loss tensors in their NATIVE dtype
    (f32 / bf16); ragged tails must be NaN-padded.  `tn` caps the constraint-axis
    block; `tt` (optional) caps the T-axis block (default: auto, ~4 MiB blocks /
    full rows when they fit).
    """
    n, T = loss_tensors.shape
    if n == 0:
        return jnp.zeros((), jnp.float32), jnp.zeros((0,), jnp.float32)

    dtype = loss_tensors.dtype
    itemsize = jnp.dtype(dtype).itemsize

    # ---- constraint-axis tiling (sublane packing: f32->8, bf16->16, int8/fp8->32) ----
    pack = 8 * max(1, 4 // itemsize)
    n_pad = _pad_to(n, pack)
    TN = min(n_pad, _pad_to(max(tn, pack), pack))
    n_pad = _pad_to(n_pad, TN)
    grid_i = n_pad // TN

    # ---- T-axis tiling ----
    T128 = _pad_to(T, 128)
    # v7x megacore: if all constraints fit one row-block, split T across a leading
    # size-2 "parallel" axis so both TensorCores stream (harmless on v5e/v6e).
    P = 2 if (grid_i == 1 and T128 >= 256) else 1
    t_pad = _pad_to(T128, P * 128)
    per_half = t_pad // P
    if tt is None:
        # target ~4 MiB input blocks: big enough to amortize per-grid-step overhead
        # at >=0.8 TB/s HBM, small enough to double-buffer inside scoped VMEM
        tt_cap = max(128, ((4 << 20) // (TN * itemsize)) // 128 * 128)
    else:
        tt_cap = max(128, _pad_to(tt, 128))
    # hard safety cap so double-buffered blocks always fit the VMEM budget
    tt_cap = min(tt_cap, max(128, ((16 << 20) // (TN * itemsize)) // 128 * 128))
    TT = min(per_half, tt_cap)
    t_pad = _pad_to(t_pad, P * TT)
    per_half = t_pad // P
    grid_k = per_half // TT

    if (n_pad, t_pad) != (n, T):
        # NaN padding is ignored by the masked sum (same contract as ragged tails)
        loss_tensors = jnp.pad(loss_tensors, ((0, n_pad - n), (0, t_pad - T)),
                               constant_values=np.nan)

    grid = (P, grid_i, grid_k)

    # ---- VMEM budget: double-buffered in/out blocks + slack; floor 32 MiB (v5e
    #      scoped default is 16 MiB), cap 48 MiB (v7x physical is 64 MiB / TC) ----
    block_in = TN * TT * itemsize
    block_out = TN * 128 * 4
    vmem_limit = int(min(max(2 * block_in + 2 * block_out + (4 << 20), 32 << 20),
                         48 << 20))

    cost = pl.CostEstimate(
        flops=2 * n_pad * t_pad,
        transcendentals=0,
        bytes_accessed=n_pad * t_pad * itemsize + P * n_pad * 128 * 4)

    partial = pl.pallas_call(
        _rowsum_kernel,
        out_shape=jax.ShapeDtypeStruct((P, n_pad, 128), jnp.float32),
        grid_spec=pltpu.PrefetchScalarGridSpec(
            num_scalar_prefetch=0,
            grid=grid,
            in_specs=[pl.BlockSpec((TN, TT),
                                   lambda p, i, k: (i, p * grid_k + k))],
            out_specs=pl.BlockSpec((None, TN, 128),
                                   lambda p, i, k: (p, i, 0)),
        ),
        compiler_params=pltpu.CompilerParams(
            # p and i axes "parallel" (shards across v7x's 2 TensorCores),
            # T-reduction axis last + "arbitrary" (resident output accumulator)
            dimension_semantics=("parallel", "parallel", "arbitrary"),
            vmem_limit_bytes=vmem_limit),
        cost_estimate=cost,
    )(loss_tensors)

    # O(nconstr) tail on the tiny (P, n, 128) partial-sum array (wrapper side)
    row_sums = jnp.sum(partial, axis=(0, 2))[:n]              # masked per-row sums
    lam = jnp.minimum(lmbd, lmbd_p).astype(jnp.float32)       # get_lmbd: clamp(max=lmbd_p)
    per = lam * row_sums                                      # per-constraint loss_
    total = jnp.sum(per)                                      # lmbd_loss = sum(loss_)
    return total, per


def ref_forward(loss_tensors, lmbd, lmbd_p):
    x = jnp.maximum(loss_tensors.astype(jnp.float32), 0.0)    # clamp(min=0)
    x = jnp.where(jnp.isnan(x), 0.0, x)                       # nan-sum mask
    s = x.sum(axis=-1)
    lam = jnp.minimum(lmbd, lmbd_p)
    per = lam * s
    return per.sum(), per


if __name__ == "__main__":
    key = jax.random.PRNGKey(0)

    def make_inputs(k, nconstr, T, dtype):
        k1, k2, k3 = jax.random.split(k, 3)
        # reset_parameters(): lmbd initialized to constant 1.0
        lmbd = jnp.ones((nconstr,), dtype=jnp.float32)
        # lmbd_p[i] = -log(1 - p_i), p_i = lc.p / 100  (p == 1 -> 0.999999999999999)
        p_raw = np.asarray(jax.random.randint(k3, (nconstr,), 50, 101),
                           dtype=np.float64) / 100.0
        p_raw = np.where(p_raw == 1.0, 0.999999999999999, p_raw)
        lmbd_p = jnp.asarray(-np.log(1.0 - p_raw), dtype=jnp.float32)
        # synthetic stacked constraint loss tensors (what calculateLcLoss returns),
        # ragged rows NaN-padded + a few in-range NaNs
        loss = jax.random.normal(k1, (nconstr, T), dtype=jnp.float32)
        lengths = jnp.maximum(
            (jax.random.uniform(k2, (nconstr,)) * T).astype(jnp.int32), 1)
        col = jnp.arange(T)[None, :]
        loss = jnp.where(col < lengths[:, None], loss, jnp.nan)
        nan_mask = jax.random.uniform(k2, (nconstr, T)) < 0.05
        loss = jnp.where(nan_mask, jnp.nan, loss)
        return loss.astype(dtype), lmbd, lmbd_p

    kA, kB, kC = jax.random.split(key, 3)

    # Config A: tiny f32; single row-block, T split across the leading parallel axis
    lossA, lmbdA, lmbdpA = make_inputs(kA, 6, 200, jnp.float32)
    totalA, perA = lossmodel_forward(lossA, lmbdA, lmbdpA)
    jax.block_until_ready((totalA, perA))
    refA_total, refA_per = ref_forward(lossA, lmbdA, lmbdpA)
    np.testing.assert_allclose(np.asarray(perA), np.asarray(refA_per),
                               rtol=1e-5, atol=1e-5)
    np.testing.assert_allclose(float(totalA), float(refA_total),
                               rtol=1e-5, atol=1e-5)

    # Config B: bf16, forced small T tile -> exercises the carried accumulator along
    #           the k axis (multi-k), native-bf16 clamp/mask, row padding
    lossB, lmbdB, lmbdpB = make_inputs(kB, 12, 512, jnp.bfloat16)
    totalB, perB = lossmodel_forward(lossB, lmbdB, lmbdpB, tt=128)
    jax.block_until_ready((totalB, perB))
    refB_total, refB_per = ref_forward(lossB, lmbdB, lmbdpB)
    np.testing.assert_allclose(np.asarray(perB), np.asarray(refB_per),
                               rtol=1e-4, atol=1e-4)
    np.testing.assert_allclose(float(totalB), float(refB_total),
                               rtol=1e-4, atol=1e-4)

    # Config C: multiple row-blocks (grid_i > 1), full-row TT with > _UNROLL_MAX lane
    #           chunks -> exercises the fori_loop chunk path
    lossC, lmbdC, lmbdpC = make_inputs(kC, 20, 4480, jnp.float32)
    totalC, perC = lossmodel_forward(lossC, lmbdC, lmbdpC, tn=8)
    jax.block_until_ready((totalC, perC))
    refC_total, refC_per = ref_forward(lossC, lmbdC, lmbdpC)
    np.testing.assert_allclose(np.asarray(perC), np.asarray(refC_per),
                               rtol=1e-5, atol=1e-5)
    np.testing.assert_allclose(float(totalC), float(refC_total),
                               rtol=1e-5, atol=1e-5)

    # TODO(synk): graph traversal / DataNodeBuilder bookkeeping (datanode construction,
    # calculateLcLoss dispatch, MacroAverageTracker updates) is host-side Python with
    # no Pallas equivalent.
    print("KERNEL_OK")
</pallas_src>

<mosaic_0001>
module attributes {stable_mosaic.version = 11 : i64} {
  func.func @_rowsum_kernel(%arg0: i32, %arg1: i32, %arg2: i32, %arg3: memref<8x128xf32, #tpu.memory_space<vmem>>, %arg4: memref<1x8x128xf32, #tpu.memory_space<vmem>>) attributes {dimension_semantics = [#tpu.dimension_semantics<parallel>, #tpu.dimension_semantics<parallel>, #tpu.dimension_semantics<arbitrary>], iteration_bounds = array<i64: 2, 1, 1>, scalar_prefetch = 0 : i64, scratch_operands = 0 : i64, tpu.core_type = #tpu.core_type<tc>, window_params = [{transform_indices = @transform_0, window_bounds = array<i64: 8, 128>}, {transform_indices = @transform_1, window_bounds = array<i64: 1, 8, 128>}]} {
    %c0_i32 = arith.constant 0 : i32
    %0 = arith.cmpi eq, %arg2, %c0_i32 : i32
    %1 = arith.extui %0 : i1 to i32
    %c0_i32_0 = arith.constant 0 : i32
    %2 = arith.cmpi ne, %1, %c0_i32_0 : i32
    scf.if %2 {
      %cst_9 = arith.constant 0.000000e+00 : f32
      %14 = vector.broadcast %cst_9 : f32 to vector<8x128xf32>
      %c0_10 = arith.constant 0 : index
      %c0_11 = arith.constant 0 : index
      %c0_12 = arith.constant 0 : index
      %15 = vector.load %arg4[%c0_10, %c0_11, %c0_12] : memref<1x8x128xf32, #tpu.memory_space<vmem>>, vector<1x8x128xf32>
      %16 = vector.shape_cast %15 : vector<1x8x128xf32> to vector<8x128xf32>
      %17 = vector.shape_cast %14 : vector<8x128xf32> to vector<1x8x128xf32>
      tpu.vector_store %arg4[%c0_10, %c0_11, %c0_12], %17 {strides = array<i32>} : memref<1x8x128xf32, #tpu.memory_space<vmem>>, vector<1x8x128xf32>,
    } else {
    }
    %c0 = arith.constant 0 : index
    %c0_1 = arith.constant 0 : index
    %c0_2 = arith.constant 0 : index
    %3 = vector.load %arg4[%c0, %c0_1, %c0_2] : memref<1x8x128xf32, #tpu.memory_space<vmem>>, vector<1x8x128xf32>
    %4 = vector.shape_cast %3 : vector<1x8x128xf32> to vector<8x128xf32>
    %c0_3 = arith.constant 0 : index
    %c0_4 = arith.constant 0 : index
    %5 = vector.load %arg3[%c0_3, %c0_4] : memref<8x128xf32, #tpu.memory_space<vmem>>, vector<8x128xf32>
    %cst = arith.constant 0.000000e+00 : f32
    %6 = vector.broadcast %cst : f32 to vector<8x128xf32>
    %7 = arith.cmpf ogt, %5, %6 : vector<8x128xf32>
    %cst_5 = arith.constant 0.000000e+00 : f32
    %8 = vector.broadcast %cst_5 : f32 to vector<8x128xf32>
    %9 = arith.select %7, %5, %8 : vector<8x128xi1>, vector<8x128xf32>
    %10 = arith.addf %4, %9 : vector<8x128xf32>
    %c0_6 = arith.constant 0 : index
    %c0_7 = arith.constant 0 : index
    %c0_8 = arith.constant 0 : index
    %11 = vector.load %arg4[%c0_6, %c0_7, %c0_8] : memref<1x8x128xf32, #tpu.memory_space<vmem>>, vector<1x8x128xf32>
    %12 = vector.shape_cast %11 : vector<1x8x128xf32> to vector<8x128xf32>
    %13 = vector.shape_cast %10 : vector<8x128xf32> to vector<1x8x128xf32>
    tpu.vector_store %arg4[%c0_6, %c0_7, %c0_8], %13 {strides = array<i32>} : memref<1x8x128xf32, #tpu.memory_space<vmem>>, vector<1x8x128xf32>,
    return
  }
  func.func @transform_0(%arg0: i32, %arg1: i32, %arg2: i32) -> (i32, i32) {
    %c1_i32 = arith.constant 1 : i32
    %0 = arith.muli %arg0, %c1_i32 : i32
    %1 = arith.addi %0, %arg2 : i32
    %c0_i32 = arith.constant 0 : i32
    return %arg1, %1 : i32, i32
  }
  func.func @transform_1(%arg0: i32, %arg1: i32, %arg2: i32) -> (i32, i32, i32) {
    %c0_i32 = arith.constant 0 : i32
    %c0_i32_0 = arith.constant 0 : i32
    return %arg0, %arg1, %c0_i32 : i32, i32, i32
  }
}

</mosaic_0001>

<llo_original>
// kernel: tpu_custom_call.1
$region0: #{tpu_custom_call.1}
  #allocation0 [shape = 'u32[]', space=smem, size = 0x4, offset = 0x4, fixed_abs, tag = 'smem constant byte address 0x4 - core index']
  #allocation1 [shape = 'u32[144,128]{1,0:T(1,128)}', space=vmem, size = 0x12000, scoped, tag = 'internal scratch']
  %s0 = inlined_call_operand.hbm [shape: f32[8,256], index: 0, kind: input, shape index: {}]
  %s1 = inlined_call_operand.hbm [shape: f32[2,8,128], index: 1, kind: output, shape index: {}]
  %s2 = sld [smem:[#allocation0]]
  $region45: #{tpu_custom_call.1} parent=0
    _
  %s4 = ssub.s32 1, %s2
  %s5 = scalar_select 0, %s4, %s2
  $region1: #{tpu_custom_call.1} parent=0
    #allocation2 [shape = 'u8[8192]{0}', space=vmem, size = 0x2000, scoped, tag = 'input window, operand 0']
    #allocation3 [shape = 's32[2]{0}', space=sflag, size = 0x8, scoped, tag = 'scoped memory for tpu_custom_call.1']
    #allocation4 [shape = 's32[2]{0}', space=sflag, size = 0x8, scoped, tag = 'scoped memory for tpu_custom_call.1']
    #allocation5 [shape = 'u8[8192]{0}', space=vmem, size = 0x2000, scoped, tag = 'output window, operand 0']
    %6 = vsyncpa [#allocation3], 0
    %s7 = scalar_lea.sflag [#allocation3], 1
    %8 = vsyncpa %s7, 0
    %9 = vsyncpa [#allocation4], 0
    %s10 = scalar_lea.sflag [#allocation4], 1
    %11 = vsyncpa %s10, 0
    loop: start=0, step=1, limit=4
    $region2: #{tpu_custom_call.1} parent=1 // loop_pre_header
      _
    $region3: #{tpu_custom_call.1} parent=1 // loop_header
      %s13 = sphi 0, %s17
      %p14 = scmp.ge.s32.totalorder %s13, 4
      %s20 = sphi 0, %s39
      %s21 = sphi 0, %s35
      %s22 = sphi 0, %s31
      %s23 = sphi 0, %s20
      %s24 = sphi 0, %s21
      %s25 = sphi 0, %s22
      %s26 = sphi 0, %s23
      %s27 = sphi 0, %s24
      %s28 = sphi 0, %s25
      %s46 = sphi 0, %s48
      %s49 = sphi 0, %s46
      %s50 = sphi 0, %s49
      %s66 = sphi 0, %s50
      %s74 = sphi 0, %s76
      %s77 = sphi 0, %s74
      %s78 = sphi 0, %s77
      %s94 = sphi 0, %s78
    $region4: #{tpu_custom_call.1} parent=1 // loop_header_branch
      %16 = sbr.rel (%p14) target = $region8
    $region5: #{tpu_custom_call.1} parent=1 // loop_body
      %s18 = ssub.s32 %s13, 1
      %s19 = ssub.s32 %s13, 2
      %s29 = sadd.s32 1, %s22
      %p30 = scmp.ge.s32.totalorder %s29, 1
      %s31 = scalar_select %p30, 0, %s29
      %s32 = sadd.s32 1, %s21
      %s33 = scalar_select %p30, %s32, %s21
      %p34 = scmp.ge.s32.totalorder %s33, 1
      %s35 = scalar_select %p34, 0, %s33
      %s36 = sadd.s32 1, %s20
      %s37 = scalar_select %p34, %s36, %s20
      %p38 = scmp.ge.s32.totalorder %s37, 2
      %s39 = scalar_select %p38, 0, %s37
      %s40 = sadd.s32 %s20, %s22
      %s41 = sadd.s32 %s39, %s31
      %s42 = ssub.s32 %s21, %s35
      %s43 = ssub.s32 %s40, %s41
      %s44 = sor.u32 %s42, %s43
      %p45 = scmp.eq.s32.totalorder %s44, 0
      %s47 = sadd.s32 %s46, 1
      %s48 = scalar_select %p45, %s46, %s47
      %p51 = pneg %p45
      %p52 = scmp.eq.s32.totalorder %s13, 1
      %p53 = por %p51, %p52
      %p54 = scmp.ne.s32.totalorder %s46, %s49
      %p55 = scmp.eq.s32.totalorder %s13, 0
      %p56 = por %p54, %p55
      %p57 = scmp.ne.s32.totalorder %s46, %s49
      %p58 = scmp.eq.s32.totalorder %s18, 1
      %p59 = por %p57, %p58
      %p60 = scmp.ne.s32.totalorder %s49, %s50
      %p61 = scmp.eq.s32.totalorder %s18, 0
      %p62 = por %p60, %p61
      %p63 = scmp.ne.s32.totalorder %s49, %s50
      %p64 = scmp.eq.s32.totalorder %s19, 1
      %p65 = por %p63, %p64
      %p67 = scmp.ne.s32.totalorder %s50, %s66
      %p68 = scmp.eq.s32.totalorder %s19, 0
      %p69 = por %p67, %p68
      %s70 = ssub.s32 %s20, %s39
      %s71 = ssub.s32 %s21, %s35
      %s72 = sor.u32 %s70, %s71
      %p73 = scmp.eq.s32.totalorder %s72, 0
      %s75 = sadd.s32 %s74, 1
      %s76 = scalar_select %p73, %s74, %s75
      %p79 = pneg %p73
      %p80 = scmp.eq.s32.totalorder %s13, 1
      %p81 = por %p79, %p80
      %p82 = scmp.ne.s32.totalorder %s74, %s77
      %p83 = scmp.eq.s32.totalorder %s13, 0
      %p84 = por %p82, %p83
      %p85 = scmp.ne.s32.totalorder %s74, %s77
      %p86 = scmp.eq.s32.totalorder %s18, 1
      %p87 = por %p85, %p86
      %p88 = scmp.ne.s32.totalorder %s77, %s78
      %p89 = scmp.eq.s32.totalorder %s18, 0
      %p90 = por %p88, %p89
      %p91 = scmp.ne.s32.totalorder %s77, %s78
      %p92 = scmp.eq.s32.totalorder %s19, 1
      %p93 = por %p91, %p92
      %p95 = scmp.ne.s32.totalorder %s78, %s94
      %p96 = scmp.eq.s32.totalorder %s19, 0
      %p97 = por %p95, %p96
      %p98 = scmp.le.s32.totalorder 1, %s13
      %p99 = scmp.lt.s32.totalorder %s13, 3
      %p100 = pnand %p98, %p99
      %p101 = pneg %p100
      // Predicated region
      $region9: #{tpu_custom_call.1} parent=5 // pred_check
        _
      $region10: #{tpu_custom_call.1} parent=5 // pred_check_branch
        %103 = sbr.rel (%p100) target = $region12
      $region11: #{tpu_custom_call.1} parent=5 // pred_region
        %s104 = ssub.s32 %s13, 1
      $region12: #{tpu_custom_call.1} parent=5 // pred_fallthru
        _
      %p105 = scmp.lt.s32.totalorder %s13, 2
      // Predicated region
      $region13: #{tpu_custom_call.1} parent=5 // pred_check
        %p106 = pneg %p105
      $region14: #{tpu_custom_call.1} parent=5 // pred_check_branch
        %108 = sbr.rel (%p106) target = $region16
      $region15: #{tpu_custom_call.1} parent=5 // pred_region
        // Predicated region
        $region17: #{tpu_custom_call.1} parent=15 // pred_check
          %p109 = pneg %p56
        $region18: #{tpu_custom_call.1} parent=15 // pred_check_branch
          %111 = sbr.rel (%p109) target = $region20
        $region19: #{tpu_custom_call.1} parent=15 // pred_region
          %s112 = sand.u32 %s46, 1
          %s113 = scalar_lea.sflag [#allocation3], %s112
          %s114 = sand.u32 %s46, 1
          %s115 = smul.addr %s114, 8
          %s116 = scalar_lea.vmem [#allocation2], %s115
          %s117 = sadd.s32 %s20, %s22
          %s119 = ssub.s32 128, 128
          %120 = vsyncadd %s113, %s119
          %s121 = smul.addr %s21, 2
          %s122 = sadd.s32 %s117, %s121
          %s123 = smul.addr %s122, 128
          %s124 = scalar_lea.hbm %s0, %s123
          %s126 = sshll.u32 %s116, 4
          %s127 = int_to_ptr.vmem [resolvable:$true] %s126
          %129 = dma.hbm_to_vmem [thread:$0]  %s124, 128, %s127, %s113
        $region20: #{tpu_custom_call.1} parent=15 // pred_fallthru
          _
      $region16: #{tpu_custom_call.1} parent=5 // pred_fallthru
        _
      %p130 = scmp.le.s32.totalorder 1, %s13
      %p131 = scmp.lt.s32.totalorder %s13, 3
      %p132 = pnand %p130, %p131
      %p133 = pneg %p132
      // Predicated region
      $region21: #{tpu_custom_call.1} parent=5 // pred_check
        _
      $region22: #{tpu_custom_call.1} parent=5 // pred_check_branch
        %135 = sbr.rel (%p132) target = $region24
      $region23: #{tpu_custom_call.1} parent=5 // pred_region
        %s136 = ssub.s32 %s13, 1
        %s137 = sand.u32 %s49, 1
        %s138 = scalar_lea.sflag [#allocation3], %s137
        %s139 = sand.u32 %s49, 1
        %s140 = smul.addr %s139, 8
        %s141 = scalar_lea.vmem [#allocation2], %s140
        // Predicated region
        $region25: #{tpu_custom_call.1} parent=23 // pred_check
          %p142 = pneg %p62
        $region26: #{tpu_custom_call.1} parent=23 // pred_check_branch
          %144 = sbr.rel (%p142) target = $region28
        $region27: #{tpu_custom_call.1} parent=23 // pred_region
          %145 = dma.done %s138, 128
        $region28: #{tpu_custom_call.1} parent=23 // pred_fallthru
          _
        %s146 = sand.u32 %s49, 1
        %s147 = scalar_lea.sflag [#allocation3], %s146
        %s148 = sand.u32 %s49, 1
        %s149 = smul.addr %s148, 8
        %s150 = scalar_lea.vmem [#allocation2], %s149
        %p151 = pneg %p62
        %p152 = pneg %p59
        %p153 = pneg %p90
        %p154 = pneg %p87
        %s155 = sand.u32 %s77, 1
        %s156 = scalar_lea.sflag [#allocation4], %s155
        %s157 = sand.u32 %s77, 1
        %s158 = smul.addr %s157, 8
        %s159 = scalar_lea.vmem [#allocation5], %s158
        %s160 = sadd.s32 %s23, %s25
        %p161 = scmp.eq.s32.totalorder %s25, 0
        // Predicated region
        $region29: #{tpu_custom_call.1} parent=23 // pred_check
          %p162 = pneg %p161
        $region30: #{tpu_custom_call.1} parent=23 // pred_check_branch
          %164 = sbr.rel (%p162) target = $region32
        $region31: #{tpu_custom_call.1} parent=23 // pred_region
          %165 = vst [vmem:[%s159] sm:$0xff] 0.0
        $region32: #{tpu_custom_call.1} parent=23 // pred_fallthru
          _
        %v166 = vld [vmem:[%s159] sm:$0xff]
        %v167 = vld [vmem:[%s141] sm:$0xff]
        %vm168 = vcmp.gt.f32.partialorder %v167, 0.0
        %v169 = vsel %vm168, %v167, 0.0
        %v170 = vadd.f32 %v166, %v169
        %171 = vst [vmem:[%s159] sm:$0xff] %v170
        %s172 = sand.u32 %s77, 1
        %s173 = scalar_lea.sflag [#allocation4], %s172
        %s174 = sand.u32 %s77, 1
        %s175 = smul.addr %s174, 8
        %s176 = scalar_lea.vmem [#allocation5], %s175
        // Predicated region
        $region33: #{tpu_custom_call.1} parent=23 // pred_check
          %p177 = pneg %p87
        $region34: #{tpu_custom_call.1} parent=23 // pred_check_branch
          %179 = sbr.rel (%p177) target = $region36
        $region35: #{tpu_custom_call.1} parent=23 // pred_region
          %s181 = ssub.s32 128, 128
          %182 = vsyncadd %s173, %s181
          %s183 = sadd.s32 %s24, %s23
          %s184 = smul.addr %s183, 128
          %s185 = scalar_lea.hbm %s1, %s184
          %s187 = sshll.u32 %s176, 4
          %s188 = int_to_ptr.vmem [resolvable:$true] %s187
          %190 = dma.vmem_to_hbm [thread:$0]  %s188, 128, %s185, %s173
        $region36: #{tpu_custom_call.1} parent=23 // pred_fallthru
          _
      $region24: #{tpu_custom_call.1} parent=5 // pred_fallthru
        _
      %p191 = scmp.le.s32.totalorder 2, %s13
      // Predicated region
      $region37: #{tpu_custom_call.1} parent=5 // pred_check
        %p192 = pneg %p191
      $region38: #{tpu_custom_call.1} parent=5 // pred_check_branch
        %194 = sbr.rel (%p192) target = $region40
      $region39: #{tpu_custom_call.1} parent=5 // pred_region
        %s195 = ssub.s32 %s13, 2
        // Predicated region
        $region41: #{tpu_custom_call.1} parent=39 // pred_check
          %p196 = pneg %p93
        $region42: #{tpu_custom_call.1} parent=39 // pred_check_branch
          %198 = sbr.rel (%p196) target = $region44
        $region43: #{tpu_custom_call.1} parent=39 // pred_region
          %s199 = sand.u32 %s78, 1
          %s200 = scalar_lea.sflag [#allocation4], %s199
          %s201 = sand.u32 %s78, 1
          %s202 = smul.addr %s201, 8
          %s203 = scalar_lea.vmem [#allocation5], %s202
          %204 = dma.done %s200, 128
        $region44: #{tpu_custom_call.1} parent=39 // pred_fallthru
          _
      $region40: #{tpu_custom_call.1} parent=5 // pred_fallthru
        _
    $region6: #{tpu_custom_call.1} parent=1 // loop_footer
      %s17 = sadd.s32 1, %s13
    $region7: #{tpu_custom_call.1} parent=1 // loop_footer_branch
      %12 = sbr.rel target = $region3
    $region8: #{tpu_custom_call.1} parent=1 // loop_exit
      _
    %205 = vsyncpa [#allocation3], 1
    %s206 = scalar_lea.sflag [#allocation3], 1
    %207 = vsyncpa %s206, 1
    %208 = vsyncpa [#allocation4], 1
    %s209 = scalar_lea.sflag [#allocation4], 1
    %210 = vsyncpa %s209, 1

</llo_original>
